<compile_context>
chip_gen: v7x
topology: tpu7x:2x2x1
jax: 0.10.0
libtpu: 0.0.40
codegen_flags: <defaults>
</compile_context>

<pallas_src>
import jax
import jax.numpy as jnp
from jax import lax
from jax.experimental import pallas as pl
from jax.experimental.pallas import tpu as pltpu

INP = 4
HID = 24
OUT = 2
NEG_SLOPE = 0.01          # PyTorch nn.LeakyReLU default negative_slope

CHUNK_B = 512             # lanes per in-kernel compute chunk (multiple of 128)
DEFAULT_TILE_B = 4096     # lanes per grid step (multiple of CHUNK_B)


def _leaky_relu(x):
    return jnp.where(x > 0, x, NEG_SLOPE * x)


def _cdiv(a, b):
    return -(-a // b)


def _round_up(n, m):
    return ((n + m - 1) // m) * m


def mlp_kernel(x_ref, w1_ref, b1_ref, w2_ref, b2_ref, w3_ref, b3_ref, o_ref):
    """x_ref: [TB, INP] raw batch tile (batch on sublanes, as stored in HBM).
       w*: PyTorch [out, in] layout, b*: [out, 1] columns.
       o_ref: [OUT, TB]  (batch on lanes -> lane-dense stores).

       Compute is batch-on-lanes: per 512-lane chunk,
         h1^T = lrelu(w1 @ x^T + b1); h2^T = lrelu(w2 @ h1^T + b2); o^T = w3 @ h2^T + b3
       The x^T is folded into the first matmul as an A @ B^T contraction."""
    w1 = w1_ref[...]                                   # [HID, INP]
    w2 = w2_ref[...]                                   # [HID, HID]
    w3 = w3_ref[...]                                   # [OUT, HID]

    tb = x_ref.shape[0]
    n_chunks = tb // CHUNK_B                           # static; tb % CHUNK_B == 0

    # Hoist the lane-broadcasts of the biases out of the chunk loop
    # (JAX does not CSE broadcast_in_dim).
    b1 = jnp.broadcast_to(b1_ref[...], (HID, CHUNK_B))
    b2 = jnp.broadcast_to(b2_ref[...], (HID, CHUNK_B))
    b3 = jnp.broadcast_to(b3_ref[...], (OUT, CHUNK_B))

    def chunk_body(c, carry):
        start = pl.multiple_of(c * CHUNK_B, CHUNK_B)
        x_c = x_ref[pl.ds(start, CHUNK_B), :]          # [CHUNK_B, INP]

        # h1^T = w1 @ x_c^T : contract the in_features axis of both (A @ B^T).
        h1 = lax.dot_general(w1, x_c, (((1,), (1,)), ((), ())),
                             preferred_element_type=jnp.float32)   # [HID, CHUNK_B]
        h1 = _leaky_relu(h1 + b1)

        h2 = jnp.dot(w2, h1, preferred_element_type=jnp.float32)   # [HID, CHUNK_B]
        h2 = _leaky_relu(h2 + b2)

        o = jnp.dot(w3, h2, preferred_element_type=jnp.float32)    # [OUT, CHUNK_B]
        o_ref[:, pl.ds(start, CHUNK_B)] = (o + b3).astype(o_ref.dtype)
        return carry

    lax.fori_loop(0, n_chunks, chunk_body, None, unroll=True)


def _choose_batch_tile(batch, tile_b):
    """Chunk-aligned, balanced batch tile: avoids a nearly-empty trailing step
    when B is just above a tile boundary."""
    tile_b = max(CHUNK_B, (int(tile_b) // CHUNK_B) * CHUNK_B)
    n_steps = _cdiv(batch, tile_b)
    return _round_up(_cdiv(batch, n_steps), CHUNK_B)


def act_model_forward(x, params, tile_b=DEFAULT_TILE_B):
    """x: [B, INP] float32.  params: dict of (W, b) per layer in PyTorch layout
    (W: [out_features, in_features], b: [out_features]).  Returns [B, OUT]."""
    x = jnp.asarray(x, jnp.float32)
    B = x.shape[0]

    w1, b1 = params["fc1"]
    w2, b2 = params["fc2"]
    w3, b3 = params["fc3"]

    w1 = jnp.asarray(w1, jnp.float32)                  # [HID, INP]
    w2 = jnp.asarray(w2, jnp.float32)                  # [HID, HID]
    w3 = jnp.asarray(w3, jnp.float32)                  # [OUT, HID]
    b1c = jnp.asarray(b1, jnp.float32).reshape(HID, 1)
    b2c = jnp.asarray(b2, jnp.float32).reshape(HID, 1)
    b3c = jnp.asarray(b3, jnp.float32).reshape(OUT, 1)

    tb = _choose_batch_tile(B, tile_b)
    grid = (_cdiv(B, tb),)                             # ragged last block handled by Pallas
    const = lambda i: (0, 0)                           # weights/biases stay VMEM-resident

    out_t = pl.pallas_call(
        mlp_kernel,
        out_shape=jax.ShapeDtypeStruct((OUT, B), jnp.float32),
        grid=grid,
        in_specs=[
            pl.BlockSpec((tb, INP), lambda i: (i, 0)),   # raw x batch tile
            pl.BlockSpec((HID, INP), const),             # w1
            pl.BlockSpec((HID, 1), const),               # b1
            pl.BlockSpec((HID, HID), const),             # w2
            pl.BlockSpec((HID, 1), const),               # b2
            pl.BlockSpec((OUT, HID), const),             # w3
            pl.BlockSpec((OUT, 1), const),               # b3
        ],
        out_specs=pl.BlockSpec((OUT, tb), lambda i: (0, i)),
        compiler_params=pltpu.CompilerParams(
            dimension_semantics=("parallel",)),          # megacore on v7x
    )(x, w1, b1c, w2, b2c, w3, b3c)

    # Tiny [2, B] -> [B, 2] transpose; skip if the consumer accepts action-major.
    return out_t.T


def init_params(key):
    """Deterministic init mimicking PyTorch nn.Linear default
    (U(-k, k), k = 1/sqrt(fan_in))."""
    def linear(key, fan_in, fan_out):
        kw, kb = jax.random.split(key)
        bound = 1.0 / jnp.sqrt(float(fan_in))
        w = jax.random.uniform(kw, (fan_out, fan_in), jnp.float32, -bound, bound)
        b = jax.random.uniform(kb, (fan_out,), jnp.float32, -bound, bound)
        return w, b

    k1, k2, k3 = jax.random.split(key, 3)
    return {
        "fc1": linear(k1, INP, HID),
        "fc2": linear(k2, HID, HID),
        "fc3": linear(k3, HID, OUT),
    }


def reference_forward(x, params):
    """Pure-JAX reference replicating the PyTorch forward."""
    w1, b1 = params["fc1"]
    w2, b2 = params["fc2"]
    w3, b3 = params["fc3"]
    h = _leaky_relu(x @ w1.T + b1)
    h = _leaky_relu(h @ w2.T + b2)
    return h @ w3.T + b3


if __name__ == "__main__":
    key = jax.random.PRNGKey(0)
    kp, kx = jax.random.split(key)

    params = init_params(kp)

    # batch_size from the original spec; INP=4 state features.
    B = 50
    x = jax.random.normal(kx, (B, INP), jnp.float32)

    y = jax.block_until_ready(act_model_forward(x, params))
    y_ref = reference_forward(x, params)
    assert y.shape == (B, OUT)
    assert jnp.allclose(y, y_ref, atol=1e-4, rtol=1e-4), "mismatch vs reference (B=50)"

    # Exercise the multi-step grid + ragged last block path with a small tile.
    B2 = 1200
    x2 = jax.random.normal(jax.random.PRNGKey(1), (B2, INP), jnp.float32)
    y2 = jax.block_until_ready(act_model_forward(x2, params, tile_b=512))
    assert jnp.allclose(y2, reference_forward(x2, params), atol=1e-4, rtol=1e-4), \
        "mismatch vs reference (B=1200)"

    # TODO(synk): action()/replay() (epsilon-greedy sampling, replay memory, Adam/MSE
    # training loop) are host-side control logic, not part of forward(); not ported.
    print("KERNEL_OK")
</pallas_src>

<mosaic_0001>
module attributes {stable_mosaic.version = 11 : i64} {
  func.func @mlp_kernel(%arg0: i32, %arg1: memref<512x4xf32, #tpu.memory_space<vmem>>, %arg2: memref<24x4xf32, #tpu.memory_space<vmem>>, %arg3: memref<24x1xf32, #tpu.memory_space<vmem>>, %arg4: memref<24x24xf32, #tpu.memory_space<vmem>>, %arg5: memref<24x1xf32, #tpu.memory_space<vmem>>, %arg6: memref<2x24xf32, #tpu.memory_space<vmem>>, %arg7: memref<2x1xf32, #tpu.memory_space<vmem>>, %arg8: memref<2x512xf32, #tpu.memory_space<vmem>>) attributes {dimension_semantics = [#tpu.dimension_semantics<parallel>], iteration_bounds = array<i64: 1>, scalar_prefetch = 0 : i64, scratch_operands = 0 : i64, tpu.core_type = #tpu.core_type<tc>, window_params = [{transform_indices = @transform_0, window_bounds = array<i64: 512, 4>}, {pipeline_mode = #tpu.pipeline_mode<synchronous>, transform_indices = @transform_1, window_bounds = array<i64: 24, 4>}, {pipeline_mode = #tpu.pipeline_mode<synchronous>, transform_indices = @transform_2, window_bounds = array<i64: 24, 1>}, {pipeline_mode = #tpu.pipeline_mode<synchronous>, transform_indices = @transform_3, window_bounds = array<i64: 24, 24>}, {pipeline_mode = #tpu.pipeline_mode<synchronous>, transform_indices = @transform_4, window_bounds = array<i64: 24, 1>}, {pipeline_mode = #tpu.pipeline_mode<synchronous>, transform_indices = @transform_5, window_bounds = array<i64: 2, 24>}, {pipeline_mode = #tpu.pipeline_mode<synchronous>, transform_indices = @transform_6, window_bounds = array<i64: 2, 1>}, {transform_indices = @transform_7, window_bounds = array<i64: 2, 512>}]} {
    %c0 = arith.constant 0 : index
    %c0_0 = arith.constant 0 : index
    %0 = vector.load %arg2[%c0, %c0_0] : memref<24x4xf32, #tpu.memory_space<vmem>>, vector<24x4xf32>
    %c0_1 = arith.constant 0 : index
    %c0_2 = arith.constant 0 : index
    %1 = vector.load %arg4[%c0_1, %c0_2] : memref<24x24xf32, #tpu.memory_space<vmem>>, vector<24x24xf32>
    %c0_3 = arith.constant 0 : index
    %c0_4 = arith.constant 0 : index
    %2 = vector.load %arg6[%c0_3, %c0_4] : memref<2x24xf32, #tpu.memory_space<vmem>>, vector<2x24xf32>
    %c0_5 = arith.constant 0 : index
    %c0_6 = arith.constant 0 : index
    %3 = vector.load %arg3[%c0_5, %c0_6] : memref<24x1xf32, #tpu.memory_space<vmem>>, vector<24x1xf32>
    %4 = vector.shape_cast %3 : vector<24x1xf32> to vector<24x1xf32>
    %5 = vector.broadcast %4 : vector<24x1xf32> to vector<24x512xf32>
    %c0_7 = arith.constant 0 : index
    %c0_8 = arith.constant 0 : index
    %6 = vector.load %arg5[%c0_7, %c0_8] : memref<24x1xf32, #tpu.memory_space<vmem>>, vector<24x1xf32>
    %7 = vector.shape_cast %6 : vector<24x1xf32> to vector<24x1xf32>
    %8 = vector.broadcast %7 : vector<24x1xf32> to vector<24x512xf32>
    %c0_9 = arith.constant 0 : index
    %c0_10 = arith.constant 0 : index
    %9 = vector.load %arg7[%c0_9, %c0_10] : memref<2x1xf32, #tpu.memory_space<vmem>>, vector<2x1xf32>
    %10 = vector.shape_cast %9 : vector<2x1xf32> to vector<2x1xf32>
    %11 = vector.broadcast %10 : vector<2x1xf32> to vector<2x512xf32>
    %c0_i32 = arith.constant 0 : i32
    %c512_i32 = arith.constant 512 : i32
    %12 = arith.muli %c0_i32, %c512_i32 : i32
    %13 = tpu.assume_multiple %12, 512 : i32
    %14 = arith.index_cast %13 : i32 to index
    %c0_11 = arith.constant 0 : index
    %15 = vector.load %arg1[%14, %c0_11] : memref<512x4xf32, #tpu.memory_space<vmem>>, vector<512x4xf32>
    %cst = arith.constant dense<0.000000e+00> : vector<24x512xf32>
    %16 = tpu.matmul %0, %15, %cst {dimension_numbers = #tpu.dot_dimension_numbers<[1], [1], [0], [0], [0, 0, 1, 0], [], []>} : vector<24x4xf32>, vector<512x4xf32>, vector<24x512xf32> -> vector<24x512xf32>
    %17 = arith.addf %16, %5 : vector<24x512xf32>
    %cst_12 = arith.constant 0.000000e+00 : f32
    %18 = vector.broadcast %cst_12 : f32 to vector<24x512xf32>
    %19 = arith.cmpf ogt, %17, %18 : vector<24x512xf32>
    %cst_13 = arith.constant 0.00999999977 : f32
    %20 = vector.broadcast %cst_13 : f32 to vector<24x512xf32>
    %21 = arith.mulf %20, %17 : vector<24x512xf32>
    %22 = arith.select %19, %17, %21 : vector<24x512xi1>, vector<24x512xf32>
    %cst_14 = arith.constant dense<0.000000e+00> : vector<24x512xf32>
    %23 = tpu.matmul %1, %22, %cst_14 {dimension_numbers = #tpu.dot_dimension_numbers<[1], [0], [0], [1], [0, 0, 1, 1], [], []>} : vector<24x24xf32>, vector<24x512xf32>, vector<24x512xf32> -> vector<24x512xf32>
    %24 = arith.addf %23, %8 : vector<24x512xf32>
    %cst_15 = arith.constant 0.000000e+00 : f32
    %25 = vector.broadcast %cst_15 : f32 to vector<24x512xf32>
    %26 = arith.cmpf ogt, %24, %25 : vector<24x512xf32>
    %cst_16 = arith.constant 0.00999999977 : f32
    %27 = vector.broadcast %cst_16 : f32 to vector<24x512xf32>
    %28 = arith.mulf %27, %24 : vector<24x512xf32>
    %29 = arith.select %26, %24, %28 : vector<24x512xi1>, vector<24x512xf32>
    %cst_17 = arith.constant dense<0.000000e+00> : vector<2x512xf32>
    %30 = tpu.matmul %2, %29, %cst_17 {dimension_numbers = #tpu.dot_dimension_numbers<[1], [0], [0], [1], [0, 0, 1, 1], [], []>} : vector<2x24xf32>, vector<24x512xf32>, vector<2x512xf32> -> vector<2x512xf32>
    %31 = arith.addf %30, %11 : vector<2x512xf32>
    %c0_18 = arith.constant 0 : index
    %32 = arith.index_cast %13 : i32 to index
    %33 = vector.load %arg8[%c0_18, %32] : memref<2x512xf32, #tpu.memory_space<vmem>>, vector<2x512xf32>
    tpu.vector_store %arg8[%c0_18, %32], %31 {strides = array<i32>} : memref<2x512xf32, #tpu.memory_space<vmem>>, vector<2x512xf32>,
    %c1_i32 = arith.constant 1 : i32
    return
  }
  func.func @transform_0(%arg0: i32) -> (i32, i32) {
    %c0_i32 = arith.constant 0 : i32
    %c0_i32_0 = arith.constant 0 : i32
    return %arg0, %c0_i32 : i32, i32
  }
  func.func @transform_1(%arg0: i32) -> (i32, i32) {
    %c0_i32 = arith.constant 0 : i32
    %c0_i32_0 = arith.constant 0 : i32
    %c0_i32_1 = arith.constant 0 : i32
    return %c0_i32, %c0_i32_0 : i32, i32
  }
  func.func @transform_2(%arg0: i32) -> (i32, i32) {
    %c0_i32 = arith.constant 0 : i32
    %c0_i32_0 = arith.constant 0 : i32
    %c0_i32_1 = arith.constant 0 : i32
    return %c0_i32, %c0_i32_0 : i32, i32
  }
  func.func @transform_3(%arg0: i32) -> (i32, i32) {
    %c0_i32 = arith.constant 0 : i32
    %c0_i32_0 = arith.constant 0 : i32
    %c0_i32_1 = arith.constant 0 : i32
    return %c0_i32, %c0_i32_0 : i32, i32
  }
  func.func @transform_4(%arg0: i32) -> (i32, i32) {
    %c0_i32 = arith.constant 0 : i32
    %c0_i32_0 = arith.constant 0 : i32
    %c0_i32_1 = arith.constant 0 : i32
    return %c0_i32, %c0_i32_0 : i32, i32
  }
  func.func @transform_5(%arg0: i32) -> (i32, i32) {
    %c0_i32 = arith.constant 0 : i32
    %c0_i32_0 = arith.constant 0 : i32
    %c0_i32_1 = arith.constant 0 : i32
    return %c0_i32, %c0_i32_0 : i32, i32
  }
  func.func @transform_6(%arg0: i32) -> (i32, i32) {
    %c0_i32 = arith.constant 0 : i32
    %c0_i32_0 = arith.constant 0 : i32
    %c0_i32_1 = arith.constant 0 : i32
    return %c0_i32, %c0_i32_0 : i32, i32
  }
  func.func @transform_7(%arg0: i32) -> (i32, i32) {
    %c0_i32 = arith.constant 0 : i32
    %c0_i32_0 = arith.constant 0 : i32
    return %c0_i32, %arg0 : i32, i32
  }
}

</mosaic_0001>

<llo_original>
// kernel: tpu_custom_call.1
$region0: #{tpu_custom_call.1}
  #allocation0 [shape = 'u32[]', space=smem, size = 0x4, offset = 0x4, fixed_abs, tag = 'smem constant byte address 0x4 - core index']
  #allocation1 [shape = 'u32[144,128]{1,0:T(1,128)}', space=vmem, size = 0x12000, scoped, tag = 'internal scratch']
  %s0 = inlined_call_operand.vmem [shape: f32[50,4], index: 0, kind: input, shape index: {}]
  %s1 = inlined_call_operand.vmem [shape: f32[24,4], index: 1, kind: input, shape index: {}]
  %s2 = inlined_call_operand.vmem [shape: f32[24,1], index: 2, kind: input, shape index: {}]
  %s3 = inlined_call_operand.vmem [shape: f32[24,24], index: 3, kind: input, shape index: {}]
  %s4 = inlined_call_operand.vmem [shape: f32[24,1], index: 4, kind: input, shape index: {}]
  %s5 = inlined_call_operand.vmem [shape: f32[2,24], index: 5, kind: input, shape index: {}]
  %s6 = inlined_call_operand.vmem [shape: f32[2,1], index: 6, kind: input, shape index: {}]
  %s7 = inlined_call_operand.hbm [shape: f32[2,50], index: 7, kind: output, shape index: {}]
  %s8 = sld [smem:[#allocation0]]
  $region38: #{tpu_custom_call.1} parent=0
    _
  %s10 = ssub.s32 1, %s8
  %s11 = scalar_select 0, %s10, %s8
  $region1: #{tpu_custom_call.1} parent=0
    #allocation2 [shape = 'u8[4096]{0}', space=vmem, size = 0x1000, scoped, tag = 'output window, operand 0, single buffered']
    #allocation3 [shape = 's32[1]{0}', space=sflag, size = 0x4, scoped, tag = 'scoped memory for tpu_custom_call.1']
    %12 = vsyncpa [#allocation3], 0
    // Predicated region
    $region2: #{tpu_custom_call.1} parent=1 // pred_check
      _
    $region3: #{tpu_custom_call.1} parent=1 // pred_check_branch
      %14 = sbr.rel (0) target = $region5
    $region4: #{tpu_custom_call.1} parent=1 // pred_region
      _
    $region5: #{tpu_custom_call.1} parent=1 // pred_fallthru
      _
    // Predicated region
    $region6: #{tpu_custom_call.1} parent=1 // pred_check
      _
    $region7: #{tpu_custom_call.1} parent=1 // pred_check_branch
      %16 = sbr.rel (0) target = $region9
    $region8: #{tpu_custom_call.1} parent=1 // pred_region
      _
    $region9: #{tpu_custom_call.1} parent=1 // pred_fallthru
      _
    // Predicated region
    $region10: #{tpu_custom_call.1} parent=1 // pred_check
      _
    $region11: #{tpu_custom_call.1} parent=1 // pred_check_branch
      %18 = sbr.rel (0) target = $region13
    $region12: #{tpu_custom_call.1} parent=1 // pred_region
      _
    $region13: #{tpu_custom_call.1} parent=1 // pred_fallthru
      _
    // Predicated region
    $region14: #{tpu_custom_call.1} parent=1 // pred_check
      _
    $region15: #{tpu_custom_call.1} parent=1 // pred_check_branch
      %20 = sbr.rel (0) target = $region17
    $region16: #{tpu_custom_call.1} parent=1 // pred_region
      _
    $region17: #{tpu_custom_call.1} parent=1 // pred_fallthru
      _
    // Predicated region
    $region18: #{tpu_custom_call.1} parent=1 // pred_check
      _
    $region19: #{tpu_custom_call.1} parent=1 // pred_check_branch
      %22 = sbr.rel (0) target = $region21
    $region20: #{tpu_custom_call.1} parent=1 // pred_region
      _
    $region21: #{tpu_custom_call.1} parent=1 // pred_fallthru
      _
    // Predicated region
    $region22: #{tpu_custom_call.1} parent=1 // pred_check
      _
    $region23: #{tpu_custom_call.1} parent=1 // pred_check_branch
      %24 = sbr.rel (0) target = $region25
    $region24: #{tpu_custom_call.1} parent=1 // pred_region
      _
    $region25: #{tpu_custom_call.1} parent=1 // pred_fallthru
      _
    // Predicated region
    $region26: #{tpu_custom_call.1} parent=1 // pred_check
      _
    $region27: #{tpu_custom_call.1} parent=1 // pred_check_branch
      %26 = sbr.rel (0) target = $region29
    $region28: #{tpu_custom_call.1} parent=1 // pred_region
      _
    $region29: #{tpu_custom_call.1} parent=1 // pred_fallthru
      _
    %v27 = vld [vmem:[%s1] sm:$0xff]
    %v28 = vld [vmem:[%s1 + $0x8] sm:$0xff]
    %v29 = vld [vmem:[%s1 + $0x10] sm:$0xff]
    %v30 = vld [vmem:[%s3] sm:$0xff]
    %v31 = vld [vmem:[%s3 + $0x8] sm:$0xff]
    %v32 = vld [vmem:[%s3 + $0x10] sm:$0xff]
    %v33 = vld [vmem:[%s5] sm:$0x3]
    %v34 = vld [vmem:[%s2] sm:$0xff]
    %v35 = vld [vmem:[%s2 + $0x8] sm:$0xff]
    %v36 = vld [vmem:[%s2 + $0x10] sm:$0xff]
    %38 = vset.pattern.permute.xlu0 0
    %39 = vperm.xlu0 %38, %v34
    %v40 = vpop.permute.xlu0 %39
    %43 = vset.pattern.permute.xlu0 0
    %44 = vperm.xlu0 %43, %v35
    %v45 = vpop.permute.xlu0 %44
    %48 = vset.pattern.permute.xlu0 0
    %49 = vperm.xlu0 %48, %v36
    %v50 = vpop.permute.xlu0 %49
    %v52 = vld [vmem:[%s4] sm:$0xff]
    %v53 = vld [vmem:[%s4 + $0x8] sm:$0xff]
    %v54 = vld [vmem:[%s4 + $0x10] sm:$0xff]
    %56 = vset.pattern.permute.xlu0 0
    %57 = vperm.xlu0 %56, %v52
    %v58 = vpop.permute.xlu0 %57
    %61 = vset.pattern.permute.xlu0 0
    %62 = vperm.xlu0 %61, %v53
    %v63 = vpop.permute.xlu0 %62
    %66 = vset.pattern.permute.xlu0 0
    %67 = vperm.xlu0 %66, %v54
    %v68 = vpop.permute.xlu0 %67
    %v70 = vld [vmem:[%s6] sm:$0x3]
    %72 = vset.pattern.permute.xlu0 0
    %73 = vperm.xlu0 %72, %v70
    %v74 = vpop.permute.xlu0 %73
    %v76 = vld [vmem:[%s0] sm:$0xff]
    %v77 = vld [vmem:[%s0 + $0x8] sm:$0xff]
    %v78 = vld [vmem:[%s0 + $0x10] sm:$0xff]
    %v79 = vld [vmem:[%s0 + $0x18] sm:$0xff]
    %v80 = vld [vmem:[%s0 + $0x20] sm:$0xff]
    %v81 = vld [vmem:[%s0 + $0x28] sm:$0xff]
    %v82 = vld [vmem:[%s0 + $0x30] sm:$0xff]
    %v83 = vld [vmem:[%s0 + $0x38] sm:$0xff]
    %v84 = vld [vmem:[%s0 + $0x40] sm:$0xff]
    %v85 = vld [vmem:[%s0 + $0x48] sm:$0xff]
    %v86 = vld [vmem:[%s0 + $0x50] sm:$0xff]
    %v87 = vld [vmem:[%s0 + $0x58] sm:$0xff]
    %v88 = vld [vmem:[%s0 + $0x60] sm:$0xff]
    %v89 = vld [vmem:[%s0 + $0x68] sm:$0xff]
    %v90 = vld [vmem:[%s0 + $0x70] sm:$0xff]
    %v91 = vld [vmem:[%s0 + $0x78] sm:$0xff]
    %v92 = vld [vmem:[%s0 + $0x80] sm:$0xff]
    %v93 = vld [vmem:[%s0 + $0x88] sm:$0xff]
    %v94 = vld [vmem:[%s0 + $0x90] sm:$0xff]
    %v95 = vld [vmem:[%s0 + $0x98] sm:$0xff]
    %v96 = vld [vmem:[%s0 + $0xa0] sm:$0xff]
    %v97 = vld [vmem:[%s0 + $0xa8] sm:$0xff]
    %v98 = vld [vmem:[%s0 + $0xb0] sm:$0xff]
    %v99 = vld [vmem:[%s0 + $0xb8] sm:$0xff]
    %v100 = vld [vmem:[%s0 + $0xc0] sm:$0xff]
    %v101 = vld [vmem:[%s0 + $0xc8] sm:$0xff]
    %v102 = vld [vmem:[%s0 + $0xd0] sm:$0xff]
    %v103 = vld [vmem:[%s0 + $0xd8] sm:$0xff]
    %v104 = vld [vmem:[%s0 + $0xe0] sm:$0xff]
    %v105 = vld [vmem:[%s0 + $0xe8] sm:$0xff]
    %v106 = vld [vmem:[%s0 + $0xf0] sm:$0xff]
    %v107 = vld [vmem:[%s0 + $0xf8] sm:$0xff]
    %v108 = vld [vmem:[%s0 + $0x100] sm:$0xff]
    %v109 = vld [vmem:[%s0 + $0x108] sm:$0xff]
    %v110 = vld [vmem:[%s0 + $0x110] sm:$0xff]
    %v111 = vld [vmem:[%s0 + $0x118] sm:$0xff]
    %v112 = vld [vmem:[%s0 + $0x120] sm:$0xff]
    %v113 = vld [vmem:[%s0 + $0x128] sm:$0xff]
    %v114 = vld [vmem:[%s0 + $0x130] sm:$0xff]
    %v115 = vld [vmem:[%s0 + $0x138] sm:$0xff]
    %v116 = vld [vmem:[%s0 + $0x140] sm:$0xff]
    %v117 = vld [vmem:[%s0 + $0x148] sm:$0xff]
    %v118 = vld [vmem:[%s0 + $0x150] sm:$0xff]
    %v119 = vld [vmem:[%s0 + $0x158] sm:$0xff]
    %v120 = vld [vmem:[%s0 + $0x160] sm:$0xff]
    %v121 = vld [vmem:[%s0 + $0x168] sm:$0xff]
    %v122 = vld [vmem:[%s0 + $0x170] sm:$0xff]
    %v123 = vld [vmem:[%s0 + $0x178] sm:$0xff]
    %v124 = vld [vmem:[%s0 + $0x180] sm:$0xff]
    %v125 = vld [vmem:[%s0 + $0x188] sm:$0xff]
    %v126 = vld [vmem:[%s0 + $0x190] sm:$0xff]
    %v127 = vld [vmem:[%s0 + $0x198] sm:$0xff]
    %v128 = vld [vmem:[%s0 + $0x1a0] sm:$0xff]
    %v129 = vld [vmem:[%s0 + $0x1a8] sm:$0xff]
    %v130 = vld [vmem:[%s0 + $0x1b0] sm:$0xff]
    %v131 = vld [vmem:[%s0 + $0x1b8] sm:$0xff]
    %v132 = vld [vmem:[%s0 + $0x1c0] sm:$0xff]
    %v133 = vld [vmem:[%s0 + $0x1c8] sm:$0xff]
    %v134 = vld [vmem:[%s0 + $0x1d0] sm:$0xff]
    %v135 = vld [vmem:[%s0 + $0x1d8] sm:$0xff]
    %v136 = vld [vmem:[%s0 + $0x1e0] sm:$0xff]
    %v137 = vld [vmem:[%s0 + $0x1e8] sm:$0xff]
    %v138 = vld [vmem:[%s0 + $0x1f0] sm:$0xff]
    %v139 = vld [vmem:[%s0 + $0x1f8] sm:$0xff]
    %vm140 = vcmask 31744
    %v142 = vsel %vm140, %v27, 0
    %v145 = vsel %vm140, %v28, 0
    %v148 = vsel %vm140, %v29, 0
    %v151 = vsel %vm140, %v76, 0
    %v154 = vsel %vm140, %v77, 0
    %v157 = vsel %vm140, %v78, 0
    %v160 = vsel %vm140, %v79, 0
    %v163 = vsel %vm140, %v80, 0
    %v166 = vsel %vm140, %v81, 0
    %v169 = vsel %vm140, %v82, 0
    %v172 = vsel %vm140, %v83, 0
    %v175 = vsel %vm140, %v84, 0
    %v178 = vsel %vm140, %v85, 0
    %v181 = vsel %vm140, %v86, 0
    %v184 = vsel %vm140, %v87, 0
    %v187 = vsel %vm140, %v88, 0
    %v190 = vsel %vm140, %v89, 0
    %v193 = vsel %vm140, %v90, 0
    %v196 = vsel %vm140, %v91, 0
    %v199 = vsel %vm140, %v92, 0
    %v202 = vsel %vm140, %v93, 0
    %v205 = vsel %vm140, %v94, 0
    %v208 = vsel %vm140, %v95, 0
    %v211 = vsel %vm140, %v96, 0
    %v214 = vsel %vm140, %v97, 0
    %v217 = vsel %vm140, %v98, 0
    %v220 = vsel %vm140, %v99, 0
    %v223 = vsel %vm140, %v100, 0
    %v226 = vsel %vm140, %v101, 0
    %v229 = vsel %vm140, %v102, 0
    %v232 = vsel %vm140, %v103, 0
    %v235 = vsel %vm140, %v104, 0
    %v238 = vsel %vm140, %v105, 0
    %v241 = vsel %vm140, %v106, 0
    %v244 = vsel %vm140, %v107, 0
    %v247 = vsel %vm140, %v108, 0
    %v250 = vsel %vm140, %v109, 0
    %v253 = vsel %vm140, %v110, 0
    %v256 = vsel %vm140, %v111, 0
    %v259 = vsel %vm140, %v112, 0
    %v262 = vsel %vm140, %v113, 0
    %v265 = vsel %vm140, %v114, 0
    %v268 = vsel %vm140, %v115, 0
    %v271 = vsel %vm140, %v116, 0
    %v274 = vsel %vm140, %v117, 0
    %v277 = vsel %vm140, %v118, 0
    %v280 = vsel %vm140, %v119, 0
    %v283 = vsel %vm140, %v120, 0
    %v286 = vsel %vm140, %v121, 0
    %v289 = vsel %vm140, %v122, 0
    %v292 = vsel %vm140, %v123, 0
    %v295 = vsel %vm140, %v124, 0
    %v298 = vsel %vm140, %v125, 0
    %v301 = vsel %vm140, %v126, 0
    %v304 = vsel %vm140, %v127, 0
    %v307 = vsel %vm140, %v128, 0
    %v310 = vsel %vm140, %v129, 0
    %v313 = vsel %vm140, %v130, 0
    %v316 = vsel %vm140, %v131, 0
    %v319 = vsel %vm140, %v132, 0
    %v322 = vsel %vm140, %v133, 0
    %v325 = vsel %vm140, %v134, 0
    %v328 = vsel %vm140, %v135, 0
    %v331 = vsel %vm140, %v136, 0
    %v334 = vsel %vm140, %v137, 0
    %v337 = vsel %vm140, %v138, 0
    %v340 = vsel %vm140, %v139, 0
    %342 = vmatprep.subr.mxu0 0.0
    %343 = vmatpush1.xpose.msra.mxu0 %v151
    %344 = vmatprep.subr.mxu0 0.0
    %345 = vmatpush1.xpose.msra.mxu0 %v154
    %346 = vmatprep.subr.mxu0 0.0
    %347 = vmatpush1.xpose.msra.mxu0 %v157
    %348 = vmatprep.subr.mxu0 0.0
    %349 = vmatpush1.xpose.msra.mxu0 %v160
    %350 = vmatprep.subr.mxu0 0.0
    %351 = vmatpush1.xpose.msra.mxu0 %v163
    %352 = vmatprep.subr.mxu0 0.0
    %353 = vmatpush1.xpose.msra.mxu0 %v166
    %354 = vmatprep.subr.mxu0 0.0
    %355 = vmatpush1.xpose.msra.mxu0 %v169
    %356 = vmatprep.subr.mxu0 0.0
    %357 = vmatpush1.xpose.msra.mxu0 %v172
    %358 = vmatprep.subr.mxu0 0.0
    %359 = vmatpush1.xpose.msra.mxu0 %v175
    %360 = vmatprep.subr.mxu0 0.0
    %361 = vmatpush1.xpose.msra.mxu0 %v178
    %362 = vmatprep.subr.mxu0 0.0
    %363 = vmatpush1.xpose.msra.mxu0 %v181
    %364 = vmatprep.subr.mxu0 0.0
    %365 = vmatpush1.xpose.msra.mxu0 %v184
    %366 = vmatprep.subr.mxu0 0.0
    %367 = vmatpush1.xpose.msra.mxu0 %v187
    %368 = vmatprep.subr.mxu0 0.0
    %369 = vmatpush1.xpose.msra.mxu0 %v190
    %370 = vmatprep.subr.mxu0 0.0
    %371 = vmatpush1.xpose.msra.mxu0 %v193
    %372 = vmatprep.subr.mxu0 0.0
    %373 = vmatpush1.xpose.msra.mxu0 %v196
    %374 = vmatprep.subr.mxu0 0.0
    %375 = vmatpush1.xpose.msra.mxu0 %v199
    %376 = vmatprep.subr.mxu0 0.0
    %377 = vmatpush1.xpose.msra.mxu0 %v202
    %378 = vmatprep.subr.mxu0 0.0
    %379 = vmatpush1.xpose.msra.mxu0 %v205
    %380 = vmatprep.subr.mxu0 0.0
    %381 = vmatpush1.xpose.msra.mxu0 %v208
    %382 = vmatprep.subr.mxu0 0.0
    %383 = vmatpush1.xpose.msra.mxu0 %v211
    %384 = vmatprep.subr.mxu0 0.0
    %385 = vmatpush1.xpose.msra.mxu0 %v214
    %386 = vmatprep.subr.mxu0 0.0
    %387 = vmatpush1.xpose.msra.mxu0 %v217
    %388 = vmatprep.subr.mxu0 0.0
    %389 = vmatpush1.xpose.msra.mxu0 %v220
    %390 = vmatprep.subr.mxu0 0.0
    %391 = vmatpush1.xpose.msra.mxu0 %v223
    %392 = vmatprep.subr.mxu0 0.0
    %393 = vmatpush1.xpose.msra.mxu0 %v226
    %394 = vmatprep.subr.mxu0 0.0
    %395 = vmatpush1.xpose.msra.mxu0 %v229
    %396 = vmatprep.subr.mxu0 0.0
    %397 = vmatpush1.xpose.msra.mxu0 %v232
    %398 = vmatprep.subr.mxu0 0.0
    %399 = vmatpush1.xpose.msra.mxu0 %v235
    %400 = vmatprep.subr.mxu0 0.0
    %401 = vmatpush1.xpose.msra.mxu0 %v238
    %402 = vmatprep.subr.mxu0 0.0
    %403 = vmatpush1.xpose.msra.mxu0 %v241
    %404 = vmatprep.subr.mxu0 0.0
    %405 = vmatpush1.xpose.msra.mxu0 %v244
    %406 = vmatprep.mubr.f32.mxu0 0.0
    %407 = vmatmul.mubr.f32.gmra.mrb[0].mxu0 %v142
    %v408 = vpop.f32.mrb[0].mxu0
    %v409 = vadd.f32 %v40, %v408
    %v410 = vpop.f32.mrb[0].mxu0
    %v411 = vadd.f32 %v40, %v410
    %412 = vmatprep.mubr.f32.mxu0 0.0
    %413 = vmatmul.mubr.f32.gmra.mrb[0].mxu0 %v145
    %v414 = vpop.f32.mrb[0].mxu0
    %v415 = vadd.f32 %v45, %v414
    %v416 = vpop.f32.mrb[0].mxu0
    %v417 = vadd.f32 %v45, %v416
    %418 = vmatprep.mubr.f32.mxu0 0.0
    %419 = vmatmul.mubr.f32.gmra.mrb[0].mxu0 %v148
    %v420 = vpop.f32.mrb[0].mxu0
    %v421 = vadd.f32 %v50, %v420
    %v422 = vpop.f32.mrb[0].mxu0
    %v423 = vadd.f32 %v50, %v422
    %424 = vdwg.mxu0
    %425 = vmatprep.subr.mxu0 0.0
    %426 = vmatpush1.xpose.msra.mxu0 %v247
    %427 = vmatprep.subr.mxu0 0.0
    %428 = vmatpush1.xpose.msra.mxu0 %v250
    %429 = vmatprep.subr.mxu0 0.0
    %430 = vmatpush1.xpose.msra.mxu0 %v253
    %431 = vmatprep.subr.mxu0 0.0
    %432 = vmatpush1.xpose.msra.mxu0 %v256
    %433 = vmatprep.subr.mxu0 0.0
    %434 = vmatpush1.xpose.msra.mxu0 %v259
    %435 = vmatprep.subr.mxu0 0.0
    %436 = vmatpush1.xpose.msra.mxu0 %v262
    %437 = vmatprep.subr.mxu0 0.0
    %438 = vmatpush1.xpose.msra.mxu0 %v265
    %439 = vmatprep.subr.mxu0 0.0
    %440 = vmatpush1.xpose.msra.mxu0 %v268
    %441 = vmatprep.subr.mxu0 0.0
    %442 = vmatpush1.xpose.msra.mxu0 %v271
    %443 = vmatprep.subr.mxu0 0.0
    %444 = vmatpush1.xpose.msra.mxu0 %v274
    %445 = vmatprep.subr.mxu0 0.0
    %446 = vmatpush1.xpose.msra.mxu0 %v277
    %447 = vmatprep.subr.mxu0 0.0
    %448 = vmatpush1.xpose.msra.mxu0 %v280
    %449 = vmatprep.subr.mxu0 0.0
    %450 = vmatpush1.xpose.msra.mxu0 %v283
    %451 = vmatprep.subr.mxu0 0.0
    %452 = vmatpush1.xpose.msra.mxu0 %v286
    %453 = vmatprep.subr.mxu0 0.0
    %454 = vmatpush1.xpose.msra.mxu0 %v289
    %455 = vmatprep.subr.mxu0 0.0
    %456 = vmatpush1.xpose.msra.mxu0 %v292
    %457 = vmatprep.subr.mxu0 0.0
    %458 = vmatpush1.xpose.msra.mxu0 %v295
    %459 = vmatprep.subr.mxu0 0.0
    %460 = vmatpush1.xpose.msra.mxu0 %v298
    %461 = vmatprep.subr.mxu0 0.0
    %462 = vmatpush1.xpose.msra.mxu0 %v301
    %463 = vmatprep.subr.mxu0 0.0
    %464 = vmatpush1.xpose.msra.mxu0 %v304
    %465 = vmatprep.subr.mxu0 0.0
    %466 = vmatpush1.xpose.msra.mxu0 %v307
    %467 = vmatprep.subr.mxu0 0.0
    %468 = vmatpush1.xpose.msra.mxu0 %v310
    %469 = vmatprep.subr.mxu0 0.0
    %470 = vmatpush1.xpose.msra.mxu0 %v313
    %471 = vmatprep.subr.mxu0 0.0
    %472 = vmatpush1.xpose.msra.mxu0 %v316
    %473 = vmatprep.subr.mxu0 0.0
    %474 = vmatpush1.xpose.msra.mxu0 %v319
    %475 = vmatprep.subr.mxu0 0.0
    %476 = vmatpush1.xpose.msra.mxu0 %v322
    %477 = vmatprep.subr.mxu0 0.0
    %478 = vmatpush1.xpose.msra.mxu0 %v325
    %479 = vmatprep.subr.mxu0 0.0
    %480 = vmatpush1.xpose.msra.mxu0 %v328
    %481 = vmatprep.subr.mxu0 0.0
    %482 = vmatpush1.xpose.msra.mxu0 %v331
    %483 = vmatprep.subr.mxu0 0.0
    %484 = vmatpush1.xpose.msra.mxu0 %v334
    %485 = vmatprep.subr.mxu0 0.0
    %486 = vmatpush1.xpose.msra.mxu0 %v337
    %487 = vmatprep.subr.mxu0 0.0
    %488 = vmatpush1.xpose.msra.mxu0 %v340
    %489 = vmatprep.mubr.f32.mxu0 0.0
    %490 = vmatmul.mubr.f32.gmra.mrb[0].mxu0 %v142
    %v491 = vpop.f32.mrb[0].mxu0
    %v492 = vadd.f32 %v40, %v491
    %v493 = vpop.f32.mrb[0].mxu0
    %v494 = vadd.f32 %v40, %v493
    %495 = vmatprep.mubr.f32.mxu0 0.0
    %496 = vmatmul.mubr.f32.gmra.mrb[0].mxu0 %v145
    %v497 = vpop.f32.mrb[0].mxu0
    %v498 = vadd.f32 %v45, %v497
    %v499 = vpop.f32.mrb[0].mxu0
    %v500 = vadd.f32 %v45, %v499
    %501 = vmatprep.mubr.f32.mxu0 0.0
    %502 = vmatmul.mubr.f32.gmra.mrb[0].mxu0 %v148
    %v503 = vpop.f32.mrb[0].mxu0
    %v504 = vadd.f32 %v50, %v503
    %v505 = vpop.f32.mrb[0].mxu0
    %v506 = vadd.f32 %v50, %v505
    %507 = vdwg.mxu0
    %vm508 = vcmp.gt.f32.partialorder %v409, 0.0
    %vm509 = vcmp.gt.f32.partialorder %v411, 0.0
    %vm510 = vcmp.gt.f32.partialorder %v492, 0.0
    %vm511 = vcmp.gt.f32.partialorder %v494, 0.0
    %vm512 = vcmp.gt.f32.partialorder %v415, 0.0
    %vm513 = vcmp.gt.f32.partialorder %v417, 0.0
    %vm514 = vcmp.gt.f32.partialorder %v498, 0.0
    %vm515 = vcmp.gt.f32.partialorder %v500, 0.0
    %vm516 = vcmp.gt.f32.partialorder %v421, 0.0
    %vm517 = vcmp.gt.f32.partialorder %v423, 0.0
    %vm518 = vcmp.gt.f32.partialorder %v504, 0.0
    %vm519 = vcmp.gt.f32.partialorder %v506, 0.0
    %v520 = vmul.f32 %v409, 0.01
    %v521 = vmul.f32 %v411, 0.01
    %v522 = vmul.f32 %v492, 0.01
    %v523 = vmul.f32 %v494, 0.01
    %v524 = vmul.f32 %v415, 0.01
    %v525 = vmul.f32 %v417, 0.01
    %v526 = vmul.f32 %v498, 0.01
    %v527 = vmul.f32 %v500, 0.01
    %v528 = vmul.f32 %v421, 0.01
    %v529 = vmul.f32 %v423, 0.01
    %v530 = vmul.f32 %v504, 0.01
    %v531 = vmul.f32 %v506, 0.01
    %v532 = vsel %vm508, %v409, %v520
    %v533 = vsel %vm509, %v411, %v521
    %v534 = vsel %vm510, %v492, %v522
    %v535 = vsel %vm511, %v494, %v523
    %v536 = vsel %vm512, %v415, %v524
    %v537 = vsel %vm513, %v417, %v525
    %v538 = vsel %vm514, %v498, %v526
    %v539 = vsel %vm515, %v500, %v527
    %v540 = vsel %vm516, %v421, %v528
    %v541 = vsel %vm517, %v423, %v529
    %v542 = vsel %vm518, %v504, %v530
    %v543 = vsel %vm519, %v506, %v531
    %vm544 = vcmask 195584
    %v546 = vsel %vm544, %v30, 0
    %v549 = vsel %vm544, %v31, 0
    %v552 = vsel %vm544, %v32, 0
    %554 = vmatprep.subr.mxu0 %v533
    %555 = vmatpush1.msra.mxu0 %v532
    %556 = vmatprep.subr.mxu0 %v537
    %557 = vmatpush1.msra.mxu0 %v536
    %558 = vmatprep.subr.mxu0 %v541
    %559 = vmatpush1.msra.mxu0 %v540
    %560 = vmatprep.subr.mxu0 0.0
    %561 = vmatpush1.msra.mxu0 0.0
    %562 = vmatprep.subr.mxu0 0.0
    %563 = vmatpush1.msra.mxu0 0.0
    %564 = vmatprep.subr.mxu0 0.0
    %565 = vmatpush1.msra.mxu0 0.0
    %566 = vmatprep.subr.mxu0 0.0
    %567 = vmatpush1.msra.mxu0 0.0
    %568 = vmatprep.subr.mxu0 0.0
    %569 = vmatpush1.msra.mxu0 0.0
    %570 = vmatprep.subr.mxu0 0.0
    %571 = vmatpush1.msra.mxu0 0.0
    %572 = vmatprep.subr.mxu0 0.0
    %573 = vmatpush1.msra.mxu0 0.0
    %574 = vmatprep.subr.mxu0 0.0
    %575 = vmatpush1.msra.mxu0 0.0
    %576 = vmatprep.subr.mxu0 0.0
    %577 = vmatpush1.msra.mxu0 0.0
    %578 = vmatprep.subr.mxu0 0.0
    %579 = vmatpush1.msra.mxu0 0.0
    %580 = vmatprep.subr.mxu0 0.0
    %581 = vmatpush1.msra.mxu0 0.0
    %582 = vmatprep.subr.mxu0 0.0
    %583 = vmatpush1.msra.mxu0 0.0
    %584 = vmatprep.subr.mxu0 0.0
    %585 = vmatpush1.msra.mxu0 0.0
    %586 = vmatprep.subr.mxu0 0.0
    %587 = vmatpush1.msra.mxu0 0.0
    %588 = vmatprep.subr.mxu0 0.0
    %589 = vmatpush1.msra.mxu0 0.0
    %590 = vmatprep.subr.mxu0 0.0
    %591 = vmatpush1.msra.mxu0 0.0
    %592 = vmatprep.subr.mxu0 0.0
    %593 = vmatpush1.msra.mxu0 0.0
    %594 = vmatprep.subr.mxu0 0.0
    %595 = vmatpush1.msra.mxu0 0.0
    %596 = vmatprep.subr.mxu0 0.0
    %597 = vmatpush1.msra.mxu0 0.0
    %598 = vmatprep.subr.mxu0 0.0
    %599 = vmatpush1.msra.mxu0 0.0
    %600 = vmatprep.subr.mxu0 0.0
    %601 = vmatpush1.msra.mxu0 0.0
    %602 = vmatprep.subr.mxu0 0.0
    %603 = vmatpush1.msra.mxu0 0.0
    %604 = vmatprep.subr.mxu0 0.0
    %605 = vmatpush1.msra.mxu0 0.0
    %606 = vmatprep.subr.mxu0 0.0
    %607 = vmatpush1.msra.mxu0 0.0
    %608 = vmatprep.subr.mxu0 0.0
    %609 = vmatpush1.msra.mxu0 0.0
    %610 = vmatprep.subr.mxu0 0.0
    %611 = vmatpush1.msra.mxu0 0.0
    %612 = vmatprep.subr.mxu0 0.0
    %613 = vmatpush1.msra.mxu0 0.0
    %614 = vmatprep.subr.mxu0 0.0
    %615 = vmatpush1.msra.mxu0 0.0
    %616 = vmatprep.subr.mxu0 0.0
    %617 = vmatpush1.msra.mxu0 0.0
    %618 = vmatprep.mubr.f32.mxu0 0.0
    %619 = vmatmul.mubr.f32.gmra.mrb[0].mxu0 %v546
    %v620 = vpop.f32.mrb[0].mxu0
    %v621 = vadd.f32 %v58, %v620
    %v622 = vpop.f32.mrb[0].mxu0
    %v623 = vadd.f32 %v58, %v622
    %624 = vmatprep.mubr.f32.mxu0 0.0
    %625 = vmatmul.mubr.f32.gmra.mrb[0].mxu0 %v549
    %v626 = vpop.f32.mrb[0].mxu0
    %v627 = vadd.f32 %v63, %v626
    %v628 = vpop.f32.mrb[0].mxu0
    %v629 = vadd.f32 %v63, %v628
    %630 = vmatprep.mubr.f32.mxu0 0.0
    %631 = vmatmul.mubr.f32.gmra.mrb[0].mxu0 %v552
    %v632 = vpop.f32.mrb[0].mxu0
    %v633 = vadd.f32 %v68, %v632
    %v634 = vpop.f32.mrb[0].mxu0
    %v635 = vadd.f32 %v68, %v634
    %636 = vdwg.mxu0
    %637 = vmatprep.subr.mxu0 %v535
    %638 = vmatpush1.msra.mxu0 %v534
    %639 = vmatprep.subr.mxu0 %v539
    %640 = vmatpush1.msra.mxu0 %v538
    %641 = vmatprep.subr.mxu0 %v543
    %642 = vmatpush1.msra.mxu0 %v542
    %643 = vmatprep.subr.mxu0 0.0
    %644 = vmatpush1.msra.mxu0 0.0
    %645 = vmatprep.subr.mxu0 0.0
    %646 = vmatpush1.msra.mxu0 0.0
    %647 = vmatprep.subr.mxu0 0.0
    %648 = vmatpush1.msra.mxu0 0.0
    %649 = vmatprep.subr.mxu0 0.0
    %650 = vmatpush1.msra.mxu0 0.0
    %651 = vmatprep.subr.mxu0 0.0
    %652 = vmatpush1.msra.mxu0 0.0
    %653 = vmatprep.subr.mxu0 0.0
    %654 = vmatpush1.msra.mxu0 0.0
    %655 = vmatprep.subr.mxu0 0.0
    %656 = vmatpush1.msra.mxu0 0.0
    %657 = vmatprep.subr.mxu0 0.0
    %658 = vmatpush1.msra.mxu0 0.0
    %659 = vmatprep.subr.mxu0 0.0
    %660 = vmatpush1.msra.mxu0 0.0
    %661 = vmatprep.subr.mxu0 0.0
    %662 = vmatpush1.msra.mxu0 0.0
    %663 = vmatprep.subr.mxu0 0.0
    %664 = vmatpush1.msra.mxu0 0.0
    %665 = vmatprep.subr.mxu0 0.0
    %666 = vmatpush1.msra.mxu0 0.0
    %667 = vmatprep.subr.mxu0 0.0
    %668 = vmatpush1.msra.mxu0 0.0
    %669 = vmatprep.subr.mxu0 0.0
    %670 = vmatpush1.msra.mxu0 0.0
    %671 = vmatprep.subr.mxu0 0.0
    %672 = vmatpush1.msra.mxu0 0.0
    %673 = vmatprep.subr.mxu0 0.0
    %674 = vmatpush1.msra.mxu0 0.0
    %675 = vmatprep.subr.mxu0 0.0
    %676 = vmatpush1.msra.mxu0 0.0
    %677 = vmatprep.subr.mxu0 0.0
    %678 = vmatpush1.msra.mxu0 0.0
    %679 = vmatprep.subr.mxu0 0.0
    %680 = vmatpush1.msra.mxu0 0.0
    %681 = vmatprep.subr.mxu0 0.0
    %682 = vmatpush1.msra.mxu0 0.0
    %683 = vmatprep.subr.mxu0 0.0
    %684 = vmatpush1.msra.mxu0 0.0
    %685 = vmatprep.subr.mxu0 0.0
    %686 = vmatpush1.msra.mxu0 0.0
    %687 = vmatprep.subr.mxu0 0.0
    %688 = vmatpush1.msra.mxu0 0.0
    %689 = vmatprep.subr.mxu0 0.0
    %690 = vmatpush1.msra.mxu0 0.0
    %691 = vmatprep.subr.mxu0 0.0
    %692 = vmatpush1.msra.mxu0 0.0
    %693 = vmatprep.subr.mxu0 0.0
    %694 = vmatpush1.msra.mxu0 0.0
    %695 = vmatprep.subr.mxu0 0.0
    %696 = vmatpush1.msra.mxu0 0.0
    %697 = vmatprep.subr.mxu0 0.0
    %698 = vmatpush1.msra.mxu0 0.0
    %699 = vmatprep.subr.mxu0 0.0
    %700 = vmatpush1.msra.mxu0 0.0
    %701 = vmatprep.mubr.f32.mxu0 0.0
    %702 = vmatmul.mubr.f32.gmra.mrb[0].mxu0 %v546
    %v703 = vpop.f32.mrb[0].mxu0
    %v704 = vadd.f32 %v58, %v703
    %v705 = vpop.f32.mrb[0].mxu0
    %v706 = vadd.f32 %v58, %v705
    %707 = vmatprep.mubr.f32.mxu0 0.0
    %708 = vmatmul.mubr.f32.gmra.mrb[0].mxu0 %v549
    %v709 = vpop.f32.mrb[0].mxu0
    %v710 = vadd.f32 %v63, %v709
    %v711 = vpop.f32.mrb[0].mxu0
    %v712 = vadd.f32 %v63, %v711
    %713 = vmatprep.mubr.f32.mxu0 0.0
    %714 = vmatmul.mubr.f32.gmra.mrb[0].mxu0 %v552
    %v715 = vpop.f32.mrb[0].mxu0
    %v716 = vadd.f32 %v68, %v715
    %v717 = vpop.f32.mrb[0].mxu0
    %v718 = vadd.f32 %v68, %v717
    %719 = vdwg.mxu0
    %vm720 = vcmp.gt.f32.partialorder %v621, 0.0
    %vm721 = vcmp.gt.f32.partialorder %v623, 0.0
    %vm722 = vcmp.gt.f32.partialorder %v704, 0.0
    %vm723 = vcmp.gt.f32.partialorder %v706, 0.0
    %vm724 = vcmp.gt.f32.partialorder %v627, 0.0
    %vm725 = vcmp.gt.f32.partialorder %v629, 0.0
    %vm726 = vcmp.gt.f32.partialorder %v710, 0.0
    %vm727 = vcmp.gt.f32.partialorder %v712, 0.0
    %vm728 = vcmp.gt.f32.partialorder %v633, 0.0
    %vm729 = vcmp.gt.f32.partialorder %v635, 0.0
    %vm730 = vcmp.gt.f32.partialorder %v716, 0.0
    %vm731 = vcmp.gt.f32.partialorder %v718, 0.0
    %v732 = vmul.f32 %v621, 0.01
    %v733 = vmul.f32 %v623, 0.01
    %v734 = vmul.f32 %v704, 0.01
    %v735 = vmul.f32 %v706, 0.01
    %v736 = vmul.f32 %v627, 0.01
    %v737 = vmul.f32 %v629, 0.01
    %v738 = vmul.f32 %v710, 0.01
    %v739 = vmul.f32 %v712, 0.01
    %v740 = vmul.f32 %v633, 0.01
    %v741 = vmul.f32 %v635, 0.01
    %v742 = vmul.f32 %v716, 0.01
    %v743 = vmul.f32 %v718, 0.01
    %v744 = vsel %vm720, %v621, %v732
    %v745 = vsel %vm721, %v623, %v733
    %v746 = vsel %vm722, %v704, %v734
    %v747 = vsel %vm723, %v706, %v735
    %v748 = vsel %vm724, %v627, %v736
    %v749 = vsel %vm725, %v629, %v737
    %v750 = vsel %vm726, %v710, %v738
    %v751 = vsel %vm727, %v712, %v739
    %v752 = vsel %vm728, %v633, %v740
    %v753 = vsel %vm729, %v635, %v741
    %v754 = vsel %vm730, %v716, %v742
    %v755 = vsel %vm731, %v718, %v743
    %v757 = vsel %vm544, %v33, 0
    %759 = vmatprep.subr.mxu0 %v745
    %760 = vmatpush1.msra.mxu0 %v744
    %761 = vmatprep.subr.mxu0 %v749
    %762 = vmatpush1.msra.mxu0 %v748
    %763 = vmatprep.subr.mxu0 %v753
    %764 = vmatpush1.msra.mxu0 %v752
    %765 = vmatprep.subr.mxu0 0.0
    %766 = vmatpush1.msra.mxu0 0.0
    %767 = vmatprep.subr.mxu0 0.0
    %768 = vmatpush1.msra.mxu0 0.0
    %769 = vmatprep.subr.mxu0 0.0
    %770 = vmatpush1.msra.mxu0 0.0
    %771 = vmatprep.subr.mxu0 0.0
    %772 = vmatpush1.msra.mxu0 0.0
    %773 = vmatprep.subr.mxu0 0.0
    %774 = vmatpush1.msra.mxu0 0.0
    %775 = vmatprep.subr.mxu0 0.0
    %776 = vmatpush1.msra.mxu0 0.0
    %777 = vmatprep.subr.mxu0 0.0
    %778 = vmatpush1.msra.mxu0 0.0
    %779 = vmatprep.subr.mxu0 0.0
    %780 = vmatpush1.msra.mxu0 0.0
    %781 = vmatprep.subr.mxu0 0.0
    %782 = vmatpush1.msra.mxu0 0.0
    %783 = vmatprep.subr.mxu0 0.0
    %784 = vmatpush1.msra.mxu0 0.0
    %785 = vmatprep.subr.mxu0 0.0
    %786 = vmatpush1.msra.mxu0 0.0
    %787 = vmatprep.subr.mxu0 0.0
    %788 = vmatpush1.msra.mxu0 0.0
    %789 = vmatprep.subr.mxu0 0.0
    %790 = vmatpush1.msra.mxu0 0.0
    %791 = vmatprep.subr.mxu0 0.0
    %792 = vmatpush1.msra.mxu0 0.0
    %793 = vmatprep.subr.mxu0 0.0
    %794 = vmatpush1.msra.mxu0 0.0
    %795 = vmatprep.subr.mxu0 0.0
    %796 = vmatpush1.msra.mxu0 0.0
    %797 = vmatprep.subr.mxu0 0.0
    %798 = vmatpush1.msra.mxu0 0.0
    %799 = vmatprep.subr.mxu0 0.0
    %800 = vmatpush1.msra.mxu0 0.0
    %801 = vmatprep.subr.mxu0 0.0
    %802 = vmatpush1.msra.mxu0 0.0
    %803 = vmatprep.subr.mxu0 0.0
    %804 = vmatpush1.msra.mxu0 0.0
    %805 = vmatprep.subr.mxu0 0.0
    %806 = vmatpush1.msra.mxu0 0.0
    %807 = vmatprep.subr.mxu0 0.0
    %808 = vmatpush1.msra.mxu0 0.0
    %809 = vmatprep.subr.mxu0 0.0
    %810 = vmatpush1.msra.mxu0 0.0
    %811 = vmatprep.subr.mxu0 0.0
    %812 = vmatpush1.msra.mxu0 0.0
    %813 = vmatprep.subr.mxu0 0.0
    %814 = vmatpush1.msra.mxu0 0.0
    %815 = vmatprep.subr.mxu0 0.0
    %816 = vmatpush1.msra.mxu0 0.0
    %817 = vmatprep.subr.mxu0 0.0
    %818 = vmatpush1.msra.mxu0 0.0
    %819 = vmatprep.subr.mxu0 0.0
    %820 = vmatpush1.msra.mxu0 0.0
    %821 = vmatprep.subr.mxu0 0.0
    %822 = vmatpush1.msra.mxu0 0.0
    %823 = vmatprep.mubr.f32.mxu0 0.0
    %824 = vmatmul.mubr.f32.gmra.mrb[0].mxu0 %v757
    %v825 = vpop.f32.mrb[0].mxu0
    %v826 = vadd.f32 %v74, %v825
    %v827 = vpop.f32.mrb[0].mxu0
    %v828 = vadd.f32 %v74, %v827
    %829 = vdwg.mxu0
    %830 = vmatprep.subr.mxu0 %v747
    %831 = vmatpush1.msra.mxu0 %v746
    %832 = vmatprep.subr.mxu0 %v751
    %833 = vmatpush1.msra.mxu0 %v750
    %834 = vmatprep.subr.mxu0 %v755
    %835 = vmatpush1.msra.mxu0 %v754
    %836 = vmatprep.subr.mxu0 0.0
    %837 = vmatpush1.msra.mxu0 0.0
    %838 = vmatprep.subr.mxu0 0.0
    %839 = vmatpush1.msra.mxu0 0.0
    %840 = vmatprep.subr.mxu0 0.0
    %841 = vmatpush1.msra.mxu0 0.0
    %842 = vmatprep.subr.mxu0 0.0
    %843 = vmatpush1.msra.mxu0 0.0
    %844 = vmatprep.subr.mxu0 0.0
    %845 = vmatpush1.msra.mxu0 0.0
    %846 = vmatprep.subr.mxu0 0.0
    %847 = vmatpush1.msra.mxu0 0.0
    %848 = vmatprep.subr.mxu0 0.0
    %849 = vmatpush1.msra.mxu0 0.0
    %850 = vmatprep.subr.mxu0 0.0
    %851 = vmatpush1.msra.mxu0 0.0
    %852 = vmatprep.subr.mxu0 0.0
    %853 = vmatpush1.msra.mxu0 0.0
    %854 = vmatprep.subr.mxu0 0.0
    %855 = vmatpush1.msra.mxu0 0.0
    %856 = vmatprep.subr.mxu0 0.0
    %857 = vmatpush1.msra.mxu0 0.0
    %858 = vmatprep.subr.mxu0 0.0
    %859 = vmatpush1.msra.mxu0 0.0
    %860 = vmatprep.subr.mxu0 0.0
    %861 = vmatpush1.msra.mxu0 0.0
    %862 = vmatprep.subr.mxu0 0.0
    %863 = vmatpush1.msra.mxu0 0.0
    %864 = vmatprep.subr.mxu0 0.0
    %865 = vmatpush1.msra.mxu0 0.0
    %866 = vmatprep.subr.mxu0 0.0
    %867 = vmatpush1.msra.mxu0 0.0
    %868 = vmatprep.subr.mxu0 0.0
    %869 = vmatpush1.msra.mxu0 0.0
    %870 = vmatprep.subr.mxu0 0.0
    %871 = vmatpush1.msra.mxu0 0.0
    %872 = vmatprep.subr.mxu0 0.0
    %873 = vmatpush1.msra.mxu0 0.0
    %874 = vmatprep.subr.mxu0 0.0
    %875 = vmatpush1.msra.mxu0 0.0
    %876 = vmatprep.subr.mxu0 0.0
    %877 = vmatpush1.msra.mxu0 0.0
    %878 = vmatprep.subr.mxu0 0.0
    %879 = vmatpush1.msra.mxu0 0.0
    %880 = vmatprep.subr.mxu0 0.0
    %881 = vmatpush1.msra.mxu0 0.0
    %882 = vmatprep.subr.mxu0 0.0
    %883 = vmatpush1.msra.mxu0 0.0
    %884 = vmatprep.subr.mxu0 0.0
    %885 = vmatpush1.msra.mxu0 0.0
    %886 = vmatprep.subr.mxu0 0.0
    %887 = vmatpush1.msra.mxu0 0.0
    %888 = vmatprep.subr.mxu0 0.0
    %889 = vmatpush1.msra.mxu0 0.0
    %890 = vmatprep.subr.mxu0 0.0
    %891 = vmatpush1.msra.mxu0 0.0
    %892 = vmatprep.subr.mxu0 0.0
    %893 = vmatpush1.msra.mxu0 0.0
    %894 = vmatprep.mubr.f32.mxu0 0.0
    %895 = vmatmul.mubr.f32.gmra.mrb[0].mxu0 %v757
    %v896 = vpop.f32.mrb[0].mxu0
    %v897 = vadd.f32 %v74, %v896
    %v898 = vpop.f32.mrb[0].mxu0
    %v899 = vadd.f32 %v74, %v898
    %900 = vdwg.mxu0
    %v905 = vcombine.low %v826, %v828
    %v906 = vcombine.low %v897, %v899
    %v908 = vunpack.c.l.s4 1983009808
    %v909 = vunpack.c.0.s8 %v908
    %v910 = vlaneseq
    %v911 = vshrl.u32 %v910, 7
    %v912 = vsub.s32 %v909, %v911
    %v913 = vrot.slane %v905, %v912
    %v915 = vunpack.c.l.s4 1983009808
    %v916 = vunpack.c.0.s8 %v915
    %v917 = vlaneseq
    %v918 = vshrl.u32 %v917, 7
    %v919 = vsub.s32 %v916, %v918
    %v920 = vrot.slane %v906, %v919
    %v921 = vcombine.low %v913, %v920
    %923 = vst [vmem:[#allocation2] sm:$0xff] %v921
    // Predicated region
    $region30: #{tpu_custom_call.1} parent=1 // pred_check
      _
    $region31: #{tpu_custom_call.1} parent=1 // pred_check_branch
      %925 = sbr.rel (0) target = $region33
    $region32: #{tpu_custom_call.1} parent=1 // pred_region
      %s927 = ssub.s32 128, 32
      %928 = vsyncadd [#allocation3], %s927
      %s930 = sshll.u32 [#allocation2], 4
      %s931 = int_to_ptr.vmem [resolvable:$true] %s930
      %933 = dma.vmem_to_hbm [thread:$0]  %s931, 32, %s7, [#allocation3]
    $region33: #{tpu_custom_call.1} parent=1 // pred_fallthru
      _
    // Predicated region
    $region34: #{tpu_custom_call.1} parent=1 // pred_check
      _
    $region35: #{tpu_custom_call.1} parent=1 // pred_check_branch
      %935 = sbr.rel (0) target = $region37
    $region36: #{tpu_custom_call.1} parent=1 // pred_region
      %936 = dma.done [#allocation3], 128
    $region37: #{tpu_custom_call.1} parent=1 // pred_fallthru
      _
    %937 = vsyncpa [#allocation3], 1

</llo_original>
